<compile_context>
chip_gen: v7x
topology: tpu7x:2x2x1
jax: 0.10.0
libtpu: 0.0.40
codegen_flags: <defaults>
</compile_context>

<pallas_src>
import math
from functools import partial

import jax
import jax.numpy as jnp
from jax.experimental import pallas as pl
from jax.experimental.pallas import tpu as pltpu


# ----------------------------------------------------------------------------
# Constant-buffer construction (mirrors PositionalEncoding.__init__).
# ----------------------------------------------------------------------------
def build_pe_table(d_model: int, max_len: int = 5000) -> jnp.ndarray:
    """Returns pe of shape (max_len, d_model), float32 (the PyTorch buffer is
    (max_len, 1, d_model); the batch axis is handled by the wrapper)."""
    position = jnp.arange(0, max_len, dtype=jnp.float32)[:, None]
    div_term = jnp.exp(
        jnp.arange(0, d_model, 2, dtype=jnp.float32) * (-math.log(10000.0) / d_model)
    )
    ang = position * div_term
    pe = jnp.zeros((max_len, d_model), dtype=jnp.float32)
    pe = pe.at[:, 0::2].set(jnp.sin(ang))
    pe = pe.at[:, 1::2].set(jnp.cos(ang))
    return pe


# ----------------------------------------------------------------------------
# Kernels.
# ----------------------------------------------------------------------------
def _pe_add_kernel(x_ref, pe_ref, o_ref):
    # (tseq, B*D) lane-dense add; pe slab is already batch-tiled.
    o_ref[...] = x_ref[...] + pe_ref[...]


def _pe_add_dropout_kernel(x_ref, pe_ref, bits_ref, o_ref, *, threshold, scale):
    y = x_ref[...] + pe_ref[...]
    # Integer-threshold dropout: drop iff bits < p * 2^32.
    keep = bits_ref[...] >= jnp.uint32(threshold)
    o_ref[...] = y * jnp.where(keep,
                               jnp.asarray(scale, y.dtype),
                               jnp.asarray(0, y.dtype))


# ----------------------------------------------------------------------------
# Tile sizing.
# ----------------------------------------------------------------------------
def _vmem_budget_bytes() -> int:
    physical = 64 << 20  # conservative floor (v7x physical VMEM per TC)
    try:
        info = pltpu.get_tpu_info()
        physical = int(getattr(info, "vmem_capacity_bytes", physical))
    except Exception:
        pass
    # Working-set budget for the double-buffered tiles; leaves headroom under
    # the 32 MiB scoped limit requested below (also safe for v5e's 16 MiB
    # default since we raise vmem_limit_bytes explicitly).
    return min(physical // 4, 16 << 20)


def _pick_tseq(S: int, row_bytes: int, n_arrays: int, itemsize: int) -> int:
    sub = max(8, 32 // itemsize)          # sublane multiple: 8 f32, 16 bf16, 32 int8
    budget = _vmem_budget_bytes()
    cap_rows = budget // (2 * n_arrays * max(row_bytes, 1))   # x2 double-buffering
    tseq = max(sub, min(cap_rows, 1024))  # 512-1024 rows ~= HBM roofline; keep >1 grid step for big S
    tseq -= tseq % sub
    if tseq >= S:
        return S
    return max(sub, tseq)


# ----------------------------------------------------------------------------
# Wrapper (forward of the module).
# ----------------------------------------------------------------------------
def positional_encoding(x, pe_table, *, dropout_p=0.1, training=False, seed=0):
    """x: (S, B, D).  pe_table: (max_len, D) float32.  Returns (S, B, D)."""
    S, B, D = x.shape
    if not (0.0 <= dropout_p <= 1.0):
        raise ValueError(f"dropout_p must be in [0, 1], got {dropout_p}")
    use_dropout = bool(training) and dropout_p > 0.0
    if use_dropout and dropout_p >= 1.0:
        return jnp.zeros_like(x)          # torch.nn.Dropout(p=1) zeros everything

    BD = B * D
    itemsize = jnp.dtype(x.dtype).itemsize
    x2 = x.reshape(S, BD)                 # free, contiguous reshape

    # Batch-tiled, dtype-matched pe slab (setup glue; in a real model cache this
    # per (S, B, dtype) instead of rebuilding per call).
    pe_slab = jnp.broadcast_to(
        pe_table[:S].astype(x.dtype)[:, None, :], (S, B, D)).reshape(S, BD)

    n_arrays = 4 if use_dropout else 3    # x, pe, out (+ bits)
    tseq = _pick_tseq(S, BD * itemsize, n_arrays, itemsize)

    # Pad ragged S up to a multiple of tseq (only hit when S > one tile).
    Sp = ((S + tseq - 1) // tseq) * tseq
    if Sp != S:
        x2 = jnp.pad(x2, ((0, Sp - S), (0, 0)))
        pe_slab = jnp.pad(pe_slab, ((0, Sp - S), (0, 0)))

    spec = pl.BlockSpec((tseq, BD), lambda i: (i, 0))
    in_specs = [spec, spec]
    args = [x2, pe_slab]

    if use_dropout:
        bits = jax.random.bits(jax.random.PRNGKey(seed), (Sp, BD), dtype=jnp.uint32)
        in_specs.append(spec)
        args.append(bits)
        threshold = min(int(round(dropout_p * 4294967296.0)), 0xFFFFFFFF)
        kernel = partial(_pe_add_dropout_kernel,
                         threshold=threshold,
                         scale=1.0 / (1.0 - dropout_p))
    else:
        kernel = _pe_add_kernel

    out2 = pl.pallas_call(
        kernel,
        out_shape=jax.ShapeDtypeStruct((Sp, BD), x.dtype),
        grid=(Sp // tseq,),
        in_specs=in_specs,
        out_specs=spec,
        compiler_params=pltpu.CompilerParams(
            dimension_semantics=("parallel",),   # megacore-shardable on v7x
            vmem_limit_bytes=32 << 20,
        ),
    )(*args)

    if Sp != S:
        out2 = out2[:S]
    return out2.reshape(S, B, D)


# ----------------------------------------------------------------------------
# Demo / self-check.
# ----------------------------------------------------------------------------
if __name__ == "__main__":
    # Shapes consistent with the module's (seq, batch, d_model) convention.
    S, B, D = 8, 2, 32
    MAX_LEN = 64

    key = jax.random.PRNGKey(0)
    x = jax.random.normal(key, (S, B, D), dtype=jnp.float32)
    pe_table = build_pe_table(D, MAX_LEN)

    # Eval path (dropout is identity) — deterministic check vs reference.
    out = positional_encoding(x, pe_table, dropout_p=0.1, training=False)
    out = jax.block_until_ready(out)
    ref = x + pe_table[:S][:, None, :]
    assert out.shape == (S, B, D)
    assert jnp.allclose(out, ref, atol=1e-6), "mismatch vs reference add"

    # Training path: inverted dropout — kept entries must equal ref / (1 - p).
    p = 0.1
    out_tr = positional_encoding(x, pe_table, dropout_p=p, training=True, seed=1234)
    out_tr = jax.block_until_ready(out_tr)
    assert out_tr.shape == (S, B, D)
    scale = 1.0 / (1.0 - p)
    kept = out_tr != 0
    assert jnp.allclose(jnp.where(kept, out_tr, 0.0),
                        jnp.where(kept, ref * scale, 0.0), atol=1e-5), \
        "dropout-kept entries do not match scaled reference"

    print("KERNEL_OK")
</pallas_src>

<mosaic_0001>
module attributes {stable_mosaic.version = 11 : i64} {
  func.func @_pe_add_kernel(%arg0: i32, %arg1: memref<8x64xf32, #tpu.memory_space<vmem>>, %arg2: memref<8x64xf32, #tpu.memory_space<vmem>>, %arg3: memref<8x64xf32, #tpu.memory_space<vmem>>) attributes {dimension_semantics = [#tpu.dimension_semantics<parallel>], iteration_bounds = array<i64: 1>, scalar_prefetch = 0 : i64, scratch_operands = 0 : i64, tpu.core_type = #tpu.core_type<tc>, window_params = [{transform_indices = @transform_0, window_bounds = array<i64: 8, 64>}, {transform_indices = @transform_1, window_bounds = array<i64: 8, 64>}, {transform_indices = @transform_2, window_bounds = array<i64: 8, 64>}]} {
    %c0 = arith.constant 0 : index
    %c0_0 = arith.constant 0 : index
    %0 = vector.load %arg1[%c0, %c0_0] : memref<8x64xf32, #tpu.memory_space<vmem>>, vector<8x64xf32>
    %c0_1 = arith.constant 0 : index
    %c0_2 = arith.constant 0 : index
    %1 = vector.load %arg2[%c0_1, %c0_2] : memref<8x64xf32, #tpu.memory_space<vmem>>, vector<8x64xf32>
    %2 = arith.addf %0, %1 : vector<8x64xf32>
    %c0_3 = arith.constant 0 : index
    %c0_4 = arith.constant 0 : index
    %3 = vector.load %arg3[%c0_3, %c0_4] : memref<8x64xf32, #tpu.memory_space<vmem>>, vector<8x64xf32>
    tpu.vector_store %arg3[%c0_3, %c0_4], %2 {strides = array<i32>} : memref<8x64xf32, #tpu.memory_space<vmem>>, vector<8x64xf32>,
    return
  }
  func.func @transform_0(%arg0: i32) -> (i32, i32) {
    %c0_i32 = arith.constant 0 : i32
    %c0_i32_0 = arith.constant 0 : i32
    return %arg0, %c0_i32 : i32, i32
  }
  func.func @transform_1(%arg0: i32) -> (i32, i32) {
    %c0_i32 = arith.constant 0 : i32
    %c0_i32_0 = arith.constant 0 : i32
    return %arg0, %c0_i32 : i32, i32
  }
  func.func @transform_2(%arg0: i32) -> (i32, i32) {
    %c0_i32 = arith.constant 0 : i32
    %c0_i32_0 = arith.constant 0 : i32
    return %arg0, %c0_i32 : i32, i32
  }
}

</mosaic_0001>

<llo_original>
// kernel: tpu_custom_call.1
$region0: #{tpu_custom_call.1}
  #allocation0 [shape = 'u32[]', space=smem, size = 0x4, offset = 0x4, fixed_abs, tag = 'smem constant byte address 0x4 - core index']
  #allocation1 [shape = 'u32[144,128]{1,0:T(1,128)}', space=vmem, size = 0x12000, scoped, tag = 'internal scratch']
  %s0 = inlined_call_operand.hbm [shape: f32[8,64], index: 0, kind: input, shape index: {}]
  %s1 = inlined_call_operand.hbm [shape: f32[8,64], index: 1, kind: input, shape index: {}]
  %s2 = inlined_call_operand.hbm [shape: f32[8,64], index: 2, kind: output, shape index: {}]
  %s3 = sld [smem:[#allocation0]]
  $region26: #{tpu_custom_call.1} parent=0
    _
  %s5 = ssub.s32 1, %s3
  %s6 = scalar_select 0, %s5, %s3
  $region1: #{tpu_custom_call.1} parent=0
    #allocation2 [shape = 'u8[4096]{0}', space=vmem, size = 0x1000, scoped, tag = 'input window, operand 0, single buffered']
    #allocation3 [shape = 's32[1]{0}', space=sflag, size = 0x4, scoped, tag = 'scoped memory for tpu_custom_call.1']
    #allocation4 [shape = 's32[1]{0}', space=sflag, size = 0x4, scoped, tag = 'scoped memory for tpu_custom_call.1']
    #allocation5 [shape = 'u8[4096]{0}', space=vmem, size = 0x1000, scoped, tag = 'input window, operand 1, single buffered']
    #allocation6 [shape = 's32[1]{0}', space=sflag, size = 0x4, scoped, tag = 'scoped memory for tpu_custom_call.1']
    #allocation7 [shape = 'u8[4096]{0}', space=vmem, size = 0x1000, scoped, tag = 'output window, operand 0, single buffered']
    %7 = vsyncpa [#allocation3], 0
    %8 = vsyncpa [#allocation6], 0
    %9 = vsyncpa [#allocation4], 0
    // Predicated region
    $region2: #{tpu_custom_call.1} parent=1 // pred_check
      _
    $region3: #{tpu_custom_call.1} parent=1 // pred_check_branch
      %11 = sbr.rel (0) target = $region5
    $region4: #{tpu_custom_call.1} parent=1 // pred_region
      %s13 = ssub.s32 128, 128
      %14 = vsyncadd [#allocation3], %s13
      %s16 = sshll.u32 [#allocation2], 4
      %s17 = int_to_ptr.vmem [resolvable:$true] %s16
      %19 = dma.hbm_to_vmem [thread:$0]  %s0, 128, %s17, [#allocation3]
    $region5: #{tpu_custom_call.1} parent=1 // pred_fallthru
      _
    // Predicated region
    $region6: #{tpu_custom_call.1} parent=1 // pred_check
      _
    $region7: #{tpu_custom_call.1} parent=1 // pred_check_branch
      %21 = sbr.rel (0) target = $region9
    $region8: #{tpu_custom_call.1} parent=1 // pred_region
      %s23 = ssub.s32 128, 128
      %24 = vsyncadd [#allocation6], %s23
      %s26 = sshll.u32 [#allocation5], 4
      %s27 = int_to_ptr.vmem [resolvable:$true] %s26
      %29 = dma.hbm_to_vmem [thread:$0]  %s1, 128, %s27, [#allocation6]
    $region9: #{tpu_custom_call.1} parent=1 // pred_fallthru
      _
    // Predicated region
    $region10: #{tpu_custom_call.1} parent=1 // pred_check
      _
    $region11: #{tpu_custom_call.1} parent=1 // pred_check_branch
      %31 = sbr.rel (0) target = $region13
    $region12: #{tpu_custom_call.1} parent=1 // pred_region
      %32 = dma.done [#allocation3], 128
    $region13: #{tpu_custom_call.1} parent=1 // pred_fallthru
      _
    // Predicated region
    $region14: #{tpu_custom_call.1} parent=1 // pred_check
      _
    $region15: #{tpu_custom_call.1} parent=1 // pred_check_branch
      %34 = sbr.rel (0) target = $region17
    $region16: #{tpu_custom_call.1} parent=1 // pred_region
      %35 = dma.done [#allocation6], 128
    $region17: #{tpu_custom_call.1} parent=1 // pred_fallthru
      _
    %v36 = vld [vmem:[#allocation2] sm:$0xff]
    %v37 = vld [vmem:[#allocation5] sm:$0xff]
    %v38 = vadd.f32 %v36, %v37
    %vm39 = vcmask 523264
    %40 = vst.msk [vmem:[#allocation7] sm:$0xff] %vm39, %v38
    // Predicated region
    $region18: #{tpu_custom_call.1} parent=1 // pred_check
      _
    $region19: #{tpu_custom_call.1} parent=1 // pred_check_branch
      %42 = sbr.rel (0) target = $region21
    $region20: #{tpu_custom_call.1} parent=1 // pred_region
      %s44 = ssub.s32 128, 128
      %45 = vsyncadd [#allocation4], %s44
      %s47 = sshll.u32 [#allocation7], 4
      %s48 = int_to_ptr.vmem [resolvable:$true] %s47
      %50 = dma.vmem_to_hbm [thread:$0]  %s48, 128, %s2, [#allocation4]
    $region21: #{tpu_custom_call.1} parent=1 // pred_fallthru
      _
    // Predicated region
    $region22: #{tpu_custom_call.1} parent=1 // pred_check
      _
    $region23: #{tpu_custom_call.1} parent=1 // pred_check_branch
      %52 = sbr.rel (0) target = $region25
    $region24: #{tpu_custom_call.1} parent=1 // pred_region
      %53 = dma.done [#allocation4], 128
    $region25: #{tpu_custom_call.1} parent=1 // pred_fallthru
      _
    %54 = vsyncpa [#allocation3], 1
    %55 = vsyncpa [#allocation6], 1
    %56 = vsyncpa [#allocation4], 1

</llo_original>
